<compile_context>
chip_gen: v7x
topology: tpu7x:2x2x1
jax: 0.10.0
libtpu: 0.0.40
codegen_flags: <defaults>
</compile_context>

<pallas_src>
import functools

import jax
import jax.numpy as jnp
from jax.experimental import pallas as pl
from jax.experimental.pallas import tpu as pltpu


def _round_up(a: int, b: int) -> int:
    return ((a + b - 1) // b) * b


def _vmem_capacity_bytes() -> int:
    """Physical per-core VMEM; conservative 64 MiB (v7x-sized) if undetectable."""
    try:
        info = pltpu.get_tpu_info()
        cap = int(getattr(info, "vmem_capacity_bytes", 0) or 0)
        if cap > 0:
            return cap
    except Exception:
        pass
    return 64 << 20


def _num_tensorcores() -> int:
    """TensorCores sharing one device's grid (megacore sharding). 1 if unknown."""
    try:
        return max(1, int(getattr(jax.devices()[0], "num_cores", 1)))
    except Exception:
        return 1


def _default_blocks(op_itemsize: int, phys_vmem: int):
    # 512x512 output tiles double the per-byte arithmetic intensity vs 256x256;
    # on 128-MiB-VMEM parts with packed (bf16/int8) operands go to 1024.
    if phys_vmem >= (100 << 20) and op_itemsize < 4:
        return 1024, 1024, 512
    return 512, 512, 512


def _choose_tiles(M, K, N, op_itemsize, out_itemsize,
                  block_m, block_n, block_k, phys_vmem, vmem_cap, ncores):
    sub = max(8, 32 // op_itemsize)          # sublane packing: 8 / 16 / 32 rows
    bm, bn, bk = _default_blocks(op_itemsize, phys_vmem)
    block_m = _round_up(block_m or bm, sub)
    block_n = _round_up(block_n or bn, 128)
    block_k = _round_up(block_k or bk, 128)

    tm = min(block_m, _round_up(M, sub))
    tn = min(block_n, _round_up(N, 128))
    tk = min(block_k, _round_up(K, 128))

    # v7x: keep both TensorCores fed -- ensure the parallel (i, j) extent >= 2
    # by shrinking the N tile when one output tile would cover the whole problem.
    while ncores > 1 and tn > 128:
        if (_round_up(M, tm) // tm) * (_round_up(N, tn) // tn) >= 2:
            break
        tn = max(128, _round_up(tn // 2, 128))

    # Skinny-M: with a single M tile, hold x resident across the whole N sweep
    # (K grid extent == 1) so x is read once and w is streamed exactly once.
    if _round_up(M, sub) <= tm:
        k_full = _round_up(K, 128)
        live = (2 * (tm * k_full + k_full * tn) * op_itemsize
                + 2 * tn * 4 + 2 * tm * tn * out_itemsize + tm * tn * 4)
        if live + (8 << 20) <= vmem_cap:
            tk = k_full

    live = (2 * (tm * tk + tk * tn) * op_itemsize
            + 2 * tn * 4 + 2 * tm * tn * out_itemsize + tm * tn * 4)
    vmem_limit = int(min(max(live + (8 << 20), 16 << 20), vmem_cap))
    return tm, tn, tk, vmem_limit


def _linear_relu_kernel(x_ref, w_ref, b_ref, o_ref, acc_ref):
    k = pl.program_id(2)

    @pl.when(k == 0)
    def _():
        acc_ref[...] = jnp.zeros_like(acc_ref)

    acc_ref[...] += jnp.dot(
        x_ref[...], w_ref[...], preferred_element_type=jnp.float32
    )

    @pl.when(k == pl.num_programs(2) - 1)
    def _():
        # Epilogue in f32 (bias broadcast over rows), then cast to output dtype.
        o_ref[...] = jnp.maximum(acc_ref[...] + b_ref[...], 0.0).astype(o_ref.dtype)


def _pallas_linear_relu(x_pad, w_pad, b_pad, *, tm, tn, tk, out_dtype, vmem_limit):
    Mp, Kp = x_pad.shape
    _, Np = w_pad.shape
    grid = (Mp // tm, Np // tn, Kp // tk)
    itemsize = jnp.dtype(x_pad.dtype).itemsize

    # bytes_accessed includes the panel re-read factors: x is re-read per N tile
    # (unless resident, i.e. Kp == tk), w is re-read per M tile.
    x_reads = 1 if Kp == tk else (Np // tn)
    cost = pl.CostEstimate(
        flops=2 * Mp * Np * Kp,
        transcendentals=0,
        bytes_accessed=(Mp * Kp * x_reads + Kp * Np * (Mp // tm)) * itemsize
        + Np * 4 * (Mp // tm)
        + Mp * Np * jnp.dtype(out_dtype).itemsize,
    )

    return pl.pallas_call(
        _linear_relu_kernel,
        out_shape=jax.ShapeDtypeStruct((Mp, Np), out_dtype),
        grid_spec=pltpu.PrefetchScalarGridSpec(
            num_scalar_prefetch=0,
            grid=grid,
            in_specs=[
                pl.BlockSpec((tm, tk), lambda i, j, k: (i, k)),  # x tile
                pl.BlockSpec((tk, tn), lambda i, j, k: (k, j)),  # weight tile
                pl.BlockSpec((1, tn), lambda i, j, k: (0, j)),   # bias row tile
            ],
            out_specs=pl.BlockSpec((tm, tn), lambda i, j, k: (i, j)),
            scratch_shapes=[pltpu.VMEM((tm, tn), jnp.float32)],
        ),
        compiler_params=pltpu.CompilerParams(
            dimension_semantics=("parallel", "parallel", "arbitrary"),
            vmem_limit_bytes=vmem_limit,
        ),
        cost_estimate=cost,
    )(x_pad, w_pad, b_pad)


@functools.partial(
    jax.jit,
    static_argnames=("block_m", "block_n", "block_k", "operand_dtype",
                     "small_shape_fallback"),
)
def linear_relu(x, w_t, b, *, block_m=None, block_n=None, block_k=None,
                operand_dtype=None, small_shape_fallback=True):
    """y = relu(x @ w_t + b).

    x:   [M, K]  (PyTorch nn.Linear input)
    w_t: [K, N]  (torch weight (out, in) pre-transposed so N maps to lanes)
    b:   [N]
    operand_dtype: e.g. jnp.bfloat16 on v6e/v7x for 2x MXU rate / half the
      weight DMA; accumulation stays f32. Default None keeps exact f32 numerics.
    """
    M, K = x.shape
    Kw, N = w_t.shape
    assert K == Kw, (K, Kw)
    out_dtype = x.dtype

    phys = _vmem_capacity_bytes()
    vmem_cap = max(32 << 20, int(phys * 0.8))   # never request all physical VMEM
    ncores = _num_tensorcores()

    op_dtype = operand_dtype if operand_dtype is not None else x.dtype
    op_isz = jnp.dtype(op_dtype).itemsize
    out_isz = jnp.dtype(out_dtype).itemsize

    # Small-problem fast path: pallas_call / padding overhead dominates when the
    # whole (padded) problem fits in a single default tile -- let XLA fuse it.
    bm_def, bn_def, bk_def = _default_blocks(op_isz, phys)
    if (small_shape_fallback
            and _round_up(M, 8) <= bm_def
            and _round_up(N, 128) <= bn_def
            and _round_up(K, 128) <= bk_def):
        y = jnp.dot(x, w_t, preferred_element_type=jnp.float32) + b
        return jnp.maximum(y, 0.0).astype(out_dtype)

    if operand_dtype is not None:
        x = x.astype(operand_dtype)
        w_t = w_t.astype(operand_dtype)

    tm, tn, tk, vmem_limit = _choose_tiles(
        M, K, N, op_isz, out_isz, block_m, block_n, block_k,
        phys, vmem_cap, ncores)

    Mp, Np, Kp = _round_up(M, tm), _round_up(N, tn), _round_up(K, tk)

    # Zero-pad. K padding MUST be zeros (it participates in the reduction);
    # M/N padding is sliced off below.
    if (Mp, Kp) != (M, K):
        x = jnp.pad(x, ((0, Mp - M), (0, Kp - K)))
    if (Kp, Np) != (K, N):
        w_t = jnp.pad(w_t, ((0, Kp - K), (0, Np - N)))
    b2d = jnp.pad(b.astype(jnp.float32), (0, Np - N)).reshape(1, Np)

    out = _pallas_linear_relu(x, w_t, b2d, tm=tm, tn=tn, tk=tk,
                              out_dtype=out_dtype, vmem_limit=vmem_limit)
    if (Mp, Np) != (M, N):
        out = out[:M, :N]
    return out


def make_linear_relu(weight, bias, *, operand_dtype=None, block_m=None,
                     block_n=None, block_k=None, max_batch=512):
    """Pre-transpose + pre-pad the static weight/bias once; returns f(x).

    weight: torch-convention (out_dim, in_dim); bias: (out_dim,). Avoids a
    per-call HBM pass re-padding W when K/N are not tile-aligned.
    """
    weight = jnp.asarray(weight)
    bias = jnp.asarray(bias)
    N, K = weight.shape

    phys = _vmem_capacity_bytes()
    vmem_cap = max(32 << 20, int(phys * 0.8))
    ncores = _num_tensorcores()

    op_dtype = operand_dtype if operand_dtype is not None else weight.dtype
    op_isz = jnp.dtype(op_dtype).itemsize
    sub = max(8, 32 // op_isz)

    tm, tn, tk, vmem_limit = _choose_tiles(
        max_batch, K, N, op_isz, 4, block_m, block_n, block_k,
        phys, vmem_cap, ncores)

    Kp, Np = _round_up(K, tk), _round_up(N, tn)
    w_t = weight.T
    if operand_dtype is not None:
        w_t = w_t.astype(operand_dtype)
    w_pad = jnp.pad(w_t, ((0, Kp - K), (0, Np - N)))
    b_pad = jnp.pad(bias.astype(jnp.float32), (0, Np - N)).reshape(1, Np)
    # TODO(synk): optional fp8 weight path on v7x (per-channel scale folded
    # into the bias/epilogue) for weight-dominated inference GEMMs.

    @jax.jit
    def _apply(x, wp, bp):
        M, Kx = x.shape
        assert Kx == K, (Kx, K)
        out_dtype = x.dtype
        if operand_dtype is not None:
            x = x.astype(operand_dtype)
        tm_call = min(tm, _round_up(M, sub))
        Mp = _round_up(M, tm_call)
        if (Mp, Kp) != (M, K):
            x = jnp.pad(x, ((0, Mp - M), (0, Kp - K)))
        out = _pallas_linear_relu(x, wp, bp, tm=tm_call, tn=tn, tk=tk,
                                  out_dtype=out_dtype, vmem_limit=vmem_limit)
        return out[:M, :N] if (Mp, Np) != (M, N) else out

    return lambda x: _apply(x, w_pad, b_pad)


def init_linear_params(key, in_dim, out_dim):
    """Deterministic init matching nn.Linear's uniform(-1/sqrt(in), 1/sqrt(in))."""
    kw, kb = jax.random.split(key)
    bound = 1.0 / jnp.sqrt(jnp.float32(in_dim))
    # PyTorch stores weight as (out_dim, in_dim); keep that convention here.
    weight = jax.random.uniform(kw, (out_dim, in_dim), jnp.float32, -bound, bound)
    bias = jax.random.uniform(kb, (out_dim,), jnp.float32, -bound, bound)
    return weight, bias


if __name__ == "__main__":
    key = jax.random.PRNGKey(0)
    k_x1, k_p1, k_x2, k_p2 = jax.random.split(key, 4)

    # Case 1: tiny module-demo shape, forced through the Pallas path.
    batch, in_dim, out_dim = 8, 32, 64
    x = jax.random.normal(k_x1, (batch, in_dim), jnp.float32)
    weight, bias = init_linear_params(k_p1, in_dim, out_dim)
    out = linear_relu(x, weight.T, bias, small_shape_fallback=False)
    out = jax.block_until_ready(out)
    ref = jnp.maximum(x @ weight.T + bias, 0.0)
    assert out.shape == (batch, out_dim)
    assert jnp.allclose(out, ref, atol=1e-5, rtol=1e-5)

    # Same shape through the default small-shape XLA fallback.
    out_fb = jax.block_until_ready(linear_relu(x, weight.T, bias))
    assert jnp.allclose(out_fb, ref, atol=1e-5, rtol=1e-5)

    # Case 2: non-tile-aligned multi-tile grid exercising the K-accumulator path.
    batch2, in_dim2, out_dim2 = 200, 384, 320
    x2 = jax.random.normal(k_x2, (batch2, in_dim2), jnp.float32)
    weight2, bias2 = init_linear_params(k_p2, in_dim2, out_dim2)
    out2 = linear_relu(x2, weight2.T, bias2, block_m=128, block_n=128,
                       block_k=128, small_shape_fallback=False)
    out2 = jax.block_until_ready(out2)
    ref2 = jnp.maximum(
        jnp.dot(x2, weight2.T, precision=jax.lax.Precision.HIGHEST) + bias2, 0.0)
    assert jnp.allclose(out2, ref2, atol=1e-3, rtol=1e-3)

    # Case 3: pre-padded-weight factory path (weights padded once, only x per call).
    apply_fn = make_linear_relu(weight2, bias2, max_batch=batch2)
    out3 = jax.block_until_ready(apply_fn(x2))
    assert jnp.allclose(out3, ref2, atol=1e-3, rtol=1e-3)

    print("KERNEL_OK")
</pallas_src>

<mosaic_0001>
module attributes {stable_mosaic.version = 11 : i64} {
  func.func @_linear_relu_kernel(%arg0: i32, %arg1: i32, %arg2: i32, %arg3: memref<8x128xf32, #tpu.memory_space<vmem>>, %arg4: memref<128x128xf32, #tpu.memory_space<vmem>>, %arg5: memref<1x128xf32, #tpu.memory_space<vmem>>, %arg6: memref<8x128xf32, #tpu.memory_space<vmem>>, %arg7: memref<8x128xf32, #tpu.memory_space<vmem>>) attributes {dimension_semantics = [#tpu.dimension_semantics<parallel>, #tpu.dimension_semantics<parallel>, #tpu.dimension_semantics<arbitrary>], iteration_bounds = array<i64: 1, 1, 1>, scalar_prefetch = 0 : i64, scratch_operands = 1 : i64, tpu.core_type = #tpu.core_type<tc>, window_params = [{transform_indices = @transform_0, window_bounds = array<i64: 8, 128>}, {transform_indices = @transform_1, window_bounds = array<i64: 128, 128>}, {transform_indices = @transform_2, window_bounds = array<i64: 1, 128>}, {transform_indices = @transform_3, window_bounds = array<i64: 8, 128>}]} {
    %c0_i32 = arith.constant 0 : i32
    %0 = arith.cmpi eq, %arg2, %c0_i32 : i32
    %1 = arith.extui %0 : i1 to i32
    %c0_i32_0 = arith.constant 0 : i32
    %2 = arith.cmpi ne, %1, %c0_i32_0 : i32
    scf.if %2 {
      %cst_10 = arith.constant 0.000000e+00 : f32
      %12 = vector.broadcast %cst_10 : f32 to vector<8x128xf32>
      %c0_11 = arith.constant 0 : index
      %c0_12 = arith.constant 0 : index
      %13 = vector.load %arg7[%c0_11, %c0_12] : memref<8x128xf32, #tpu.memory_space<vmem>>, vector<8x128xf32>
      tpu.vector_store %arg7[%c0_11, %c0_12], %12 {strides = array<i32>} : memref<8x128xf32, #tpu.memory_space<vmem>>, vector<8x128xf32>,
    } else {
    }
    %c0 = arith.constant 0 : index
    %c0_1 = arith.constant 0 : index
    %3 = vector.load %arg7[%c0, %c0_1] : memref<8x128xf32, #tpu.memory_space<vmem>>, vector<8x128xf32>
    %c0_2 = arith.constant 0 : index
    %c0_3 = arith.constant 0 : index
    %4 = vector.load %arg3[%c0_2, %c0_3] : memref<8x128xf32, #tpu.memory_space<vmem>>, vector<8x128xf32>
    %c0_4 = arith.constant 0 : index
    %c0_5 = arith.constant 0 : index
    %5 = vector.load %arg4[%c0_4, %c0_5] : memref<128x128xf32, #tpu.memory_space<vmem>>, vector<128x128xf32>
    %cst = arith.constant dense<0.000000e+00> : vector<8x128xf32>
    %6 = tpu.matmul %4, %5, %cst {dimension_numbers = #tpu.dot_dimension_numbers<[1], [0], [0], [1], [0, 0, 1, 1], [], []>} : vector<8x128xf32>, vector<128x128xf32>, vector<8x128xf32> -> vector<8x128xf32>
    %7 = arith.addf %3, %6 : vector<8x128xf32>
    %c0_6 = arith.constant 0 : index
    %c0_7 = arith.constant 0 : index
    %8 = vector.load %arg7[%c0_6, %c0_7] : memref<8x128xf32, #tpu.memory_space<vmem>>, vector<8x128xf32>
    tpu.vector_store %arg7[%c0_6, %c0_7], %7 {strides = array<i32>} : memref<8x128xf32, #tpu.memory_space<vmem>>, vector<8x128xf32>,
    %c0_i32_8 = arith.constant 0 : i32
    %9 = arith.cmpi eq, %arg2, %c0_i32_8 : i32
    %10 = arith.extui %9 : i1 to i32
    %c0_i32_9 = arith.constant 0 : i32
    %11 = arith.cmpi ne, %10, %c0_i32_9 : i32
    scf.if %11 {
      %c0_10 = arith.constant 0 : index
      %c0_11 = arith.constant 0 : index
      %12 = vector.load %arg7[%c0_10, %c0_11] : memref<8x128xf32, #tpu.memory_space<vmem>>, vector<8x128xf32>
      %c0_12 = arith.constant 0 : index
      %c0_13 = arith.constant 0 : index
      %13 = vector.load %arg5[%c0_12, %c0_13] : memref<1x128xf32, #tpu.memory_space<vmem>>, vector<1x128xf32>
      %14 = vector.broadcast %13 : vector<1x128xf32> to vector<8x128xf32>
      %15 = arith.addf %12, %14 : vector<8x128xf32>
      %cst_14 = arith.constant 0.000000e+00 : f32
      %16 = vector.broadcast %cst_14 : f32 to vector<8x128xf32>
      %17 = arith.maximumf %15, %16 : vector<8x128xf32>
      %c0_15 = arith.constant 0 : index
      %c0_16 = arith.constant 0 : index
      %18 = vector.load %arg6[%c0_15, %c0_16] : memref<8x128xf32, #tpu.memory_space<vmem>>, vector<8x128xf32>
      tpu.vector_store %arg6[%c0_15, %c0_16], %17 {strides = array<i32>} : memref<8x128xf32, #tpu.memory_space<vmem>>, vector<8x128xf32>,
    } else {
    }
    return
  }
  func.func @transform_0(%arg0: i32, %arg1: i32, %arg2: i32) -> (i32, i32) {
    %c0_i32 = arith.constant 0 : i32
    return %arg0, %arg2 : i32, i32
  }
  func.func @transform_1(%arg0: i32, %arg1: i32, %arg2: i32) -> (i32, i32) {
    %c0_i32 = arith.constant 0 : i32
    return %arg2, %arg1 : i32, i32
  }
  func.func @transform_2(%arg0: i32, %arg1: i32, %arg2: i32) -> (i32, i32) {
    %c0_i32 = arith.constant 0 : i32
    %c0_i32_0 = arith.constant 0 : i32
    return %c0_i32, %arg1 : i32, i32
  }
  func.func @transform_3(%arg0: i32, %arg1: i32, %arg2: i32) -> (i32, i32) {
    %c0_i32 = arith.constant 0 : i32
    return %arg0, %arg1 : i32, i32
  }
}

</mosaic_0001>

<llo_original>
// kernel: linear_relu.1
$region0: #{linear_relu.1}
  #allocation0 [shape = 'u32[]', space=smem, size = 0x4, offset = 0x4, fixed_abs, tag = 'smem constant byte address 0x4 - core index']
  #allocation1 [shape = 'u32[144,128]{1,0:T(1,128)}', space=vmem, size = 0x12000, scoped, tag = 'internal scratch']
  #allocation2 [shape = 'f32[8,128]{1,0:T(8,128)}', space=vmem, size = 0x1000, scoped, tag = 'scratch operand']
  %s0 = inlined_call_operand.vmem [shape: f32[8,128], index: 0, kind: input, shape index: {}]
  %s1 = inlined_call_operand.vmem [shape: f32[128,128], index: 1, kind: input, shape index: {}]
  %s2 = inlined_call_operand.vmem [shape: f32[1,128], index: 2, kind: input, shape index: {}]
  %s3 = inlined_call_operand.hbm [shape: f32[8,128], index: 3, kind: output, shape index: {}]
  %s4 = sld [smem:[#allocation0]]
  $region30: #{linear_relu.1} parent=0
    _
  %s6 = ssub.s32 1, %s4
  %s7 = scalar_select 0, %s6, %s4
  $region1: #{linear_relu.1} parent=0
    #allocation3 [shape = 'u8[4096]{0}', space=vmem, size = 0x1000, scoped, tag = 'output window, operand 0, single buffered']
    #allocation4 [shape = 's32[1]{0}', space=sflag, size = 0x4, scoped, tag = 'scoped memory for linear_relu.1']
    %8 = vsyncpa [#allocation4], 0
    // Predicated region
    $region2: #{linear_relu.1} parent=1 // pred_check
      _
    $region3: #{linear_relu.1} parent=1 // pred_check_branch
      %10 = sbr.rel (0) target = $region5
    $region4: #{linear_relu.1} parent=1 // pred_region
      _
    $region5: #{linear_relu.1} parent=1 // pred_fallthru
      _
    // Predicated region
    $region6: #{linear_relu.1} parent=1 // pred_check
      _
    $region7: #{linear_relu.1} parent=1 // pred_check_branch
      %12 = sbr.rel (0) target = $region9
    $region8: #{linear_relu.1} parent=1 // pred_region
      _
    $region9: #{linear_relu.1} parent=1 // pred_fallthru
      _
    // Predicated region
    $region10: #{linear_relu.1} parent=1 // pred_check
      _
    $region11: #{linear_relu.1} parent=1 // pred_check_branch
      %14 = sbr.rel (0) target = $region13
    $region12: #{linear_relu.1} parent=1 // pred_region
      _
    $region13: #{linear_relu.1} parent=1 // pred_fallthru
      _
    %p15 = scmp.eq.s32.totalorder 0, 0
    // Predicated region
    $region14: #{linear_relu.1} parent=1 // pred_check
      %p16 = pneg %p15
    $region15: #{linear_relu.1} parent=1 // pred_check_branch
      %18 = sbr.rel (%p16) target = $region17
    $region16: #{linear_relu.1} parent=1 // pred_region
      %19 = vst [vmem:[#allocation2] sm:$0xff] 0.0
    $region17: #{linear_relu.1} parent=1 // pred_fallthru
      _
    %v20 = vld [vmem:[#allocation2] sm:$0xff]
    %v21 = vld [vmem:[%s0] sm:$0xff]
    %v22 = vld [vmem:[%s1] sm:$0xff]
    %v23 = vld [vmem:[%s1 + $0x8] sm:$0xff]
    %v24 = vld [vmem:[%s1 + $0x10] sm:$0xff]
    %v25 = vld [vmem:[%s1 + $0x18] sm:$0xff]
    %v26 = vld [vmem:[%s1 + $0x20] sm:$0xff]
    %v27 = vld [vmem:[%s1 + $0x28] sm:$0xff]
    %v28 = vld [vmem:[%s1 + $0x30] sm:$0xff]
    %v29 = vld [vmem:[%s1 + $0x38] sm:$0xff]
    %v30 = vld [vmem:[%s1 + $0x40] sm:$0xff]
    %v31 = vld [vmem:[%s1 + $0x48] sm:$0xff]
    %v32 = vld [vmem:[%s1 + $0x50] sm:$0xff]
    %v33 = vld [vmem:[%s1 + $0x58] sm:$0xff]
    %v34 = vld [vmem:[%s1 + $0x60] sm:$0xff]
    %v35 = vld [vmem:[%s1 + $0x68] sm:$0xff]
    %v36 = vld [vmem:[%s1 + $0x70] sm:$0xff]
    %v37 = vld [vmem:[%s1 + $0x78] sm:$0xff]
    %38 = vmatprep.subr.mxu0 0.0
    %39 = vmatpush1.msra.mxu0 %v22
    %40 = vmatprep.subr.mxu0 0.0
    %41 = vmatpush1.msra.mxu0 %v23
    %42 = vmatprep.subr.mxu0 0.0
    %43 = vmatpush1.msra.mxu0 %v24
    %44 = vmatprep.subr.mxu0 0.0
    %45 = vmatpush1.msra.mxu0 %v25
    %46 = vmatprep.subr.mxu0 0.0
    %47 = vmatpush1.msra.mxu0 %v26
    %48 = vmatprep.subr.mxu0 0.0
    %49 = vmatpush1.msra.mxu0 %v27
    %50 = vmatprep.subr.mxu0 0.0
    %51 = vmatpush1.msra.mxu0 %v28
    %52 = vmatprep.subr.mxu0 0.0
    %53 = vmatpush1.msra.mxu0 %v29
    %54 = vmatprep.subr.mxu0 0.0
    %55 = vmatpush1.msra.mxu0 %v30
    %56 = vmatprep.subr.mxu0 0.0
    %57 = vmatpush1.msra.mxu0 %v31
    %58 = vmatprep.subr.mxu0 0.0
    %59 = vmatpush1.msra.mxu0 %v32
    %60 = vmatprep.subr.mxu0 0.0
    %61 = vmatpush1.msra.mxu0 %v33
    %62 = vmatprep.subr.mxu0 0.0
    %63 = vmatpush1.msra.mxu0 %v34
    %64 = vmatprep.subr.mxu0 0.0
    %65 = vmatpush1.msra.mxu0 %v35
    %66 = vmatprep.subr.mxu0 0.0
    %67 = vmatpush1.msra.mxu0 %v36
    %68 = vmatprep.subr.mxu0 0.0
    %69 = vmatpush1.msra.mxu0 %v37
    %70 = vmatprep.subr.mxu0 0.0
    %71 = vmatpush1.msra.mxu0 0.0
    %72 = vmatprep.subr.mxu0 0.0
    %73 = vmatpush1.msra.mxu0 0.0
    %74 = vmatprep.subr.mxu0 0.0
    %75 = vmatpush1.msra.mxu0 0.0
    %76 = vmatprep.subr.mxu0 0.0
    %77 = vmatpush1.msra.mxu0 0.0
    %78 = vmatprep.subr.mxu0 0.0
    %79 = vmatpush1.msra.mxu0 0.0
    %80 = vmatprep.subr.mxu0 0.0
    %81 = vmatpush1.msra.mxu0 0.0
    %82 = vmatprep.subr.mxu0 0.0
    %83 = vmatpush1.msra.mxu0 0.0
    %84 = vmatprep.subr.mxu0 0.0
    %85 = vmatpush1.msra.mxu0 0.0
    %86 = vmatprep.subr.mxu0 0.0
    %87 = vmatpush1.msra.mxu0 0.0
    %88 = vmatprep.subr.mxu0 0.0
    %89 = vmatpush1.msra.mxu0 0.0
    %90 = vmatprep.subr.mxu0 0.0
    %91 = vmatpush1.msra.mxu0 0.0
    %92 = vmatprep.subr.mxu0 0.0
    %93 = vmatpush1.msra.mxu0 0.0
    %94 = vmatprep.subr.mxu0 0.0
    %95 = vmatpush1.msra.mxu0 0.0
    %96 = vmatprep.subr.mxu0 0.0
    %97 = vmatpush1.msra.mxu0 0.0
    %98 = vmatprep.subr.mxu0 0.0
    %99 = vmatpush1.msra.mxu0 0.0
    %100 = vmatprep.subr.mxu0 0.0
    %101 = vmatpush1.msra.mxu0 0.0
    %102 = vmatprep.mubr.f32.mxu0 0.0
    %103 = vmatmul.mubr.f32.gmra.mrb[0].mxu0 %v21
    %v104 = vpop.f32.mrb[0].mxu0
    %v105 = vadd.f32 0.0, %v104
    %v106 = vpop.f32.mrb[0].mxu0
    %107 = vdwg.mxu0
    %v108 = vadd.f32 %v20, %v105
    %109 = vst [vmem:[#allocation2] sm:$0xff] %v108
    // Predicated region
    $region18: #{linear_relu.1} parent=1 // pred_check
      %p110 = pneg %p15
    $region19: #{linear_relu.1} parent=1 // pred_check_branch
      %112 = sbr.rel (%p110) target = $region21
    $region20: #{linear_relu.1} parent=1 // pred_region
      %v113 = vld [vmem:[#allocation2] sm:$0xff]
      %v114 = vld [vmem:[%s2] sm:$0x1]
      %v116 = vlaneseq
      %v117 = vshrl.u32 %v116, 7
      %v118 = vsub.s32 0, %v117
      %v119 = vrot.slane %v114, %v118
      %v121 = vadd.f32 %v113, %v119
      %v122 = vmax.f32 %v121, 0.0
      %123 = vst [vmem:[#allocation3] sm:$0xff] %v122
    $region21: #{linear_relu.1} parent=1 // pred_fallthru
      _
    // Predicated region
    $region22: #{linear_relu.1} parent=1 // pred_check
      _
    $region23: #{linear_relu.1} parent=1 // pred_check_branch
      %125 = sbr.rel (0) target = $region25
    $region24: #{linear_relu.1} parent=1 // pred_region
      %s127 = ssub.s32 128, 128
      %128 = vsyncadd [#allocation4], %s127
      %s130 = sshll.u32 [#allocation3], 4
      %s131 = int_to_ptr.vmem [resolvable:$true] %s130
      %133 = dma.vmem_to_hbm [thread:$0]  %s131, 128, %s3, [#allocation4]
    $region25: #{linear_relu.1} parent=1 // pred_fallthru
      _
    // Predicated region
    $region26: #{linear_relu.1} parent=1 // pred_check
      _
    $region27: #{linear_relu.1} parent=1 // pred_check_branch
      %135 = sbr.rel (0) target = $region29
    $region28: #{linear_relu.1} parent=1 // pred_region
      %136 = dma.done [#allocation4], 128
    $region29: #{linear_relu.1} parent=1 // pred_fallthru
      _
    %137 = vsyncpa [#allocation4], 1

</llo_original>
